<compile_context>
chip_gen: v5e
topology: v5e:2x2
jax: 0.10.0
libtpu: 0.0.40
codegen_flags: <defaults>
</compile_context>

<pallas_src>
import functools

import jax
import jax.numpy as jnp
from jax.experimental import pallas as pl
from jax.experimental.pallas import tpu as pltpu

LANE = 128
SUB = 8


def _round_up(x: int, m: int) -> int:
    return ((x + m - 1) // m) * m


# ----------------------------------------------------------------------------
# Kernels
# ----------------------------------------------------------------------------
def _make_mlp_kernel(n_linear: int, k_split: bool):
    """MLP over one batch tile. Ref order: x, w0, b0, ..., out[, acc_scratch]."""

    if not k_split:
        def kernel(x_ref, *refs):
            param_refs = refs[:2 * n_linear]
            out_ref = refs[2 * n_linear]
            h = x_ref[...]
            for i in range(n_linear):
                w = param_refs[2 * i][...]            # (in_pad, out_pad), bf16
                b = param_refs[2 * i + 1][...]        # (1, out_pad), f32
                h = jnp.dot(h.astype(w.dtype), w,
                            preferred_element_type=jnp.float32)
                h = h + b.astype(jnp.float32)
                if i < n_linear - 1:
                    h = jnp.maximum(h, 0.0)           # ReLU
            out_ref[...] = h.astype(out_ref.dtype)
        return kernel

    # Layer-0 streamed over K (grid = (batch_tiles, k_tiles), K is last/arbitrary)
    def kernel(x_ref, *refs):
        param_refs = refs[:2 * n_linear]
        out_ref = refs[2 * n_linear]
        acc_ref = refs[2 * n_linear + 1]              # (TM, d1_pad) f32 scratch
        k = pl.program_id(1)

        @pl.when(k == 0)
        def _():
            acc_ref[...] = jnp.zeros_like(acc_ref)

        w0 = param_refs[0][...]                       # (TK, d1_pad)
        acc_ref[...] += jnp.dot(x_ref[...].astype(w0.dtype), w0,
                                preferred_element_type=jnp.float32)

        @pl.when(k == pl.num_programs(1) - 1)
        def _():
            h = acc_ref[...] + param_refs[1][...].astype(jnp.float32)
            if n_linear > 1:
                h = jnp.maximum(h, 0.0)
            for i in range(1, n_linear):
                w = param_refs[2 * i][...]
                b = param_refs[2 * i + 1][...]
                h = jnp.dot(h.astype(w.dtype), w,
                            preferred_element_type=jnp.float32)
                h = h + b.astype(jnp.float32)
                if i < n_linear - 1:
                    h = jnp.maximum(h, 0.0)
            out_ref[...] = h.astype(out_ref.dtype)

    return kernel


# ----------------------------------------------------------------------------
# Parameter init (mirrors nn.Linear default U(-1/sqrt(fan_in), +1/sqrt(fan_in)))
# ----------------------------------------------------------------------------
def init_encoder_params(key, n_channels, seq_len, hidden_dim, bottleneck_dim,
                        n_layers=3, dtype=jnp.float32):
    in_dim = n_channels * seq_len
    dims = [in_dim] + [hidden_dim] * (n_layers - 1) + [2 * bottleneck_dim]
    params = []
    for i in range(len(dims) - 1):
        fan_in, fan_out = dims[i], dims[i + 1]
        key, kw, kb = jax.random.split(key, 3)
        bound = 1.0 / (fan_in ** 0.5)
        # Stored (in, out) so the kernel computes x @ W (== PyTorch x @ W.T).
        w = jax.random.uniform(kw, (fan_in, fan_out), dtype, -bound, bound)
        b = jax.random.uniform(kb, (1, fan_out), dtype, -bound, bound)
        params.append((w, b))
    return params


# ----------------------------------------------------------------------------
# One-time parameter prep (pad + cast) -- OUTSIDE the jit'd forward
# ----------------------------------------------------------------------------
def prepare_encoder_params(params, compute_dtype=jnp.bfloat16):
    """Zero-pad all feature dims to lane multiples; weights cast to bf16,
    biases kept f32.  Padding is mathematically inert (padded columns/rows are
    zero, so padded lanes stay zero through ReLU and subsequent layers)."""
    padded = []
    prev_pad = _round_up(params[0][0].shape[0], LANE)
    for (w, b) in params:
        fi, fo = w.shape
        fi_pad, fo_pad = prev_pad, _round_up(fo, LANE)
        w_p = jnp.zeros((fi_pad, fo_pad), compute_dtype).at[:fi, :fo].set(
            w.astype(compute_dtype))
        b_p = jnp.zeros((1, fo_pad), jnp.float32).at[:, :fo].set(
            b.reshape(1, -1).astype(jnp.float32))
        padded.extend([w_p, b_p])
        prev_pad = fo_pad
    return padded


# ----------------------------------------------------------------------------
# Forward wrapper
# ----------------------------------------------------------------------------
@functools.partial(jax.jit,
                   static_argnames=("bottleneck_dim", "k_tile",
                                    "single_buffer_params"))
def encoder_forward(x, padded_params, bottleneck_dim, k_tile=None,
                    single_buffer_params=True):
    """x: (B, n_channels, seq_len) -> (mu, logvar), each (B, bottleneck_dim)."""
    B = x.shape[0]
    x_flat = x.reshape(B, -1)                      # nn.Flatten
    in_dim = x_flat.shape[1]
    n_linear = len(padded_params) // 2

    w_dtype = padded_params[0].dtype
    in_pad = padded_params[0].shape[0]
    assert in_pad >= in_dim and in_pad % LANE == 0
    dims = [in_pad] + [padded_params[2 * i].shape[1] for i in range(n_linear)]
    out_pad = dims[-1]

    # ---- batch tiling: big tile for the 256x256 MXU, but limit padding waste
    #      and keep >= 2 tiles when possible so both v7x TensorCores get work.
    TM = min(256, _round_up(B, SUB))
    while TM > SUB and 4 * (_round_up(B, TM) - B) > _round_up(B, TM):
        TM //= 2
    if _round_up(B, TM) // TM < 2 and TM > SUB:
        TM //= 2
    TM = max(SUB, _round_up(TM, SUB))
    B_pad = _round_up(B, TM)
    grid_m = B_pad // TM

    # x tile built directly in the weight dtype (cast fused into the pad).
    x_p = jnp.zeros((B_pad, in_pad), w_dtype).at[:B, :in_dim].set(
        x_flat.astype(w_dtype))

    # ---- VMEM capacity (trace-time query; portable across v5e/v6e/v7x) ------
    try:
        cap = int(getattr(pltpu.get_tpu_info(), "vmem_capacity_bytes",
                          64 * 1024 * 1024))
    except Exception:
        cap = 64 * 1024 * 1024
    usable = int(0.85 * cap)

    # ---- layer-0 K-reduction decision ---------------------------------------
    w0_bytes = padded_params[0].size * jnp.dtype(w_dtype).itemsize
    k_split = (k_tile is not None) or (w0_bytes > int(0.4 * usable))
    if k_split:
        if k_tile is None:
            k_tile = 512 if in_pad % 512 == 0 else (
                256 if in_pad % 256 == 0 else 128)
        k_tile = min(k_tile, in_pad)
        assert in_pad % k_tile == 0
        grid = (grid_m, in_pad // k_tile)
        dim_sem = ("parallel", "arbitrary")
    else:
        grid = (grid_m,)
        dim_sem = ("parallel",)

    # Resident (constant-index) params: single-buffered to halve their VMEM.
    resident = pl.Buffered(1) if single_buffer_params else None

    # ---- BlockSpecs ----------------------------------------------------------
    in_specs = []
    if k_split:
        in_specs.append(pl.BlockSpec((TM, k_tile), lambda i, k: (i, k)))
        in_specs.append(pl.BlockSpec((k_tile, dims[1]), lambda i, k: (k, 0)))
        in_specs.append(pl.BlockSpec(padded_params[1].shape,
                                     lambda i, k: (0, 0),
                                     pipeline_mode=resident))
        for li in range(1, n_linear):
            in_specs.append(pl.BlockSpec(padded_params[2 * li].shape,
                                         lambda i, k: (0, 0),
                                         pipeline_mode=resident))
            in_specs.append(pl.BlockSpec(padded_params[2 * li + 1].shape,
                                         lambda i, k: (0, 0),
                                         pipeline_mode=resident))
        out_specs = pl.BlockSpec((TM, out_pad), lambda i, k: (i, 0))
        scratch_shapes = [pltpu.VMEM((TM, dims[1]), jnp.float32)]
    else:
        in_specs.append(pl.BlockSpec((TM, in_pad), lambda i: (i, 0)))
        for li in range(n_linear):
            in_specs.append(pl.BlockSpec(padded_params[2 * li].shape,
                                         lambda i: (0, 0),
                                         pipeline_mode=resident))
            in_specs.append(pl.BlockSpec(padded_params[2 * li + 1].shape,
                                         lambda i: (0, 0),
                                         pipeline_mode=resident))
        out_specs = pl.BlockSpec((TM, out_pad), lambda i: (i, 0))
        scratch_shapes = []

    # ---- VMEM budget ---------------------------------------------------------
    cdt = jnp.dtype(w_dtype).itemsize
    out_isz = jnp.dtype(x.dtype).itemsize
    x_k = k_tile if k_split else in_pad
    needed = 2 * TM * x_k * cdt                   # double-buffered x tile
    needed += 2 * TM * out_pad * out_isz          # double-buffered out tile
    for idx, p in enumerate(padded_params):
        if k_split and idx == 0:
            needed += 2 * k_tile * dims[1] * cdt  # streamed w0 blocks
        else:
            bufs = 1 if single_buffer_params else 2
            needed += bufs * p.size * jnp.dtype(p.dtype).itemsize
    needed += 2 * TM * max(dims) * 4              # live f32 activations
    if k_split:
        needed += TM * dims[1] * 4                # f32 accumulator scratch
    vmem_limit = int(min(max(int(1.25 * needed) + (8 << 20), 32 << 20), usable))

    out_full = pl.pallas_call(
        _make_mlp_kernel(n_linear, k_split),
        out_shape=jax.ShapeDtypeStruct((B_pad, out_pad), x.dtype),
        grid_spec=pltpu.PrefetchScalarGridSpec(
            num_scalar_prefetch=0,
            grid=grid,
            in_specs=in_specs,
            out_specs=out_specs,
            scratch_shapes=scratch_shapes,
        ),
        compiler_params=pltpu.CompilerParams(
            dimension_semantics=dim_sem,
            vmem_limit_bytes=vmem_limit,
        ),
    )(x_p, *padded_params)

    # latent reshape (-1, 2, Z): mu = first Z columns, logvar = next Z columns.
    Z = bottleneck_dim
    mu = out_full[:B, :Z]
    logvar = out_full[:B, Z:2 * Z]
    return mu, logvar


# ----------------------------------------------------------------------------
# Reference (plain JAX).  compute_dtype matches the kernel's matmul-input
# precision (bf16 feeds, f32 accumulation) for a tight comparison.
# ----------------------------------------------------------------------------
def encoder_forward_ref(x, params, bottleneck_dim, compute_dtype=jnp.float32):
    h = x.reshape(x.shape[0], -1)
    n = len(params)
    for i, (w, b) in enumerate(params):
        h = jnp.dot(h.astype(compute_dtype), w.astype(compute_dtype),
                    preferred_element_type=jnp.float32)
        h = h + b.astype(jnp.float32)
        if i < n - 1:
            h = jnp.maximum(h, 0.0)
    latent = h.reshape(-1, 2, bottleneck_dim)
    return latent[:, 0], latent[:, 1]


if __name__ == "__main__":
    key = jax.random.PRNGKey(0)

    def run(x, pp, z, k_tile=None):
        try:
            return encoder_forward(x, pp, z, k_tile=k_tile)
        except Exception:
            # Fallback if single-buffered (Buffered(1)) resident params are
            # not supported by this backend build.
            return encoder_forward(x, pp, z, k_tile=k_tile,
                                   single_buffer_params=False)

    # ---- Test 1: resident-weight path (small shapes) ------------------------
    B, C, L, H, Z = 2, 4, 8, 32, 16
    key, kx, kp = jax.random.split(key, 3)
    x = jax.random.normal(kx, (B, C, L), dtype=jnp.float32)
    params = init_encoder_params(kp, C, L, H, Z, n_layers=3)
    pp = prepare_encoder_params(params, compute_dtype=jnp.bfloat16)

    mu, logvar = run(x, pp, Z)
    jax.block_until_ready((mu, logvar))
    mu_ref, lv_ref = encoder_forward_ref(x, params, Z,
                                         compute_dtype=jnp.bfloat16)
    assert mu.shape == (B, Z) and logvar.shape == (B, Z)
    assert jnp.allclose(mu, mu_ref, atol=2e-2, rtol=2e-2)
    assert jnp.allclose(logvar, lv_ref, atol=2e-2, rtol=2e-2)

    # ---- Test 2: layer-0 K-reduction path (forced via k_tile) ---------------
    B2, C2, L2 = 4, 4, 72          # in_dim=288 -> in_pad=384 -> 3 K blocks
    key, kx2, kp2 = jax.random.split(key, 3)
    x2 = jax.random.normal(kx2, (B2, C2, L2), dtype=jnp.float32)
    params2 = init_encoder_params(kp2, C2, L2, H, Z, n_layers=3)
    pp2 = prepare_encoder_params(params2, compute_dtype=jnp.bfloat16)

    mu2, lv2 = run(x2, pp2, Z, k_tile=128)
    jax.block_until_ready((mu2, lv2))
    mu2_ref, lv2_ref = encoder_forward_ref(x2, params2, Z,
                                           compute_dtype=jnp.bfloat16)
    assert jnp.allclose(mu2, mu2_ref, atol=2e-2, rtol=2e-2)
    assert jnp.allclose(lv2, lv2_ref, atol=2e-2, rtol=2e-2)

    print("KERNEL_OK")
</pallas_src>

<mosaic_0001>
module attributes {stable_mosaic.version = 11 : i64} {
  func.func @kernel(%arg0: i32, %arg1: memref<8x128xbf16, #tpu.memory_space<vmem>>, %arg2: memref<128x128xbf16, #tpu.memory_space<vmem>>, %arg3: memref<1x128xf32, #tpu.memory_space<vmem>>, %arg4: memref<128x128xbf16, #tpu.memory_space<vmem>>, %arg5: memref<1x128xf32, #tpu.memory_space<vmem>>, %arg6: memref<128x128xbf16, #tpu.memory_space<vmem>>, %arg7: memref<1x128xf32, #tpu.memory_space<vmem>>, %arg8: memref<8x128xf32, #tpu.memory_space<vmem>>) attributes {dimension_semantics = [#tpu.dimension_semantics<parallel>], iteration_bounds = array<i64: 1>, scalar_prefetch = 0 : i64, scratch_operands = 0 : i64, tpu.core_type = #tpu.core_type<tc>, window_params = [{transform_indices = @transform_0, window_bounds = array<i64: 8, 128>}, {pipeline_mode = #tpu.pipeline_mode<synchronous>, transform_indices = @transform_1, window_bounds = array<i64: 128, 128>}, {pipeline_mode = #tpu.pipeline_mode<synchronous>, transform_indices = @transform_2, window_bounds = array<i64: 1, 128>}, {pipeline_mode = #tpu.pipeline_mode<synchronous>, transform_indices = @transform_3, window_bounds = array<i64: 128, 128>}, {pipeline_mode = #tpu.pipeline_mode<synchronous>, transform_indices = @transform_4, window_bounds = array<i64: 1, 128>}, {pipeline_mode = #tpu.pipeline_mode<synchronous>, transform_indices = @transform_5, window_bounds = array<i64: 128, 128>}, {pipeline_mode = #tpu.pipeline_mode<synchronous>, transform_indices = @transform_6, window_bounds = array<i64: 1, 128>}, {transform_indices = @transform_7, window_bounds = array<i64: 8, 128>}]} {
    %c0 = arith.constant 0 : index
    %c0_0 = arith.constant 0 : index
    %0 = vector.load %arg1[%c0, %c0_0] : memref<8x128xbf16, #tpu.memory_space<vmem>>, vector<8x128xbf16>
    %c0_1 = arith.constant 0 : index
    %c0_2 = arith.constant 0 : index
    %1 = vector.load %arg2[%c0_1, %c0_2] : memref<128x128xbf16, #tpu.memory_space<vmem>>, vector<128x128xbf16>
    %c0_3 = arith.constant 0 : index
    %c0_4 = arith.constant 0 : index
    %2 = vector.load %arg3[%c0_3, %c0_4] : memref<1x128xf32, #tpu.memory_space<vmem>>, vector<1x128xf32>
    %cst = arith.constant dense<0.000000e+00> : vector<8x128xf32>
    %3 = tpu.matmul %0, %1, %cst {dimension_numbers = #tpu.dot_dimension_numbers<[1], [0], [0], [1], [0, 0, 1, 1], [], []>} : vector<8x128xbf16>, vector<128x128xbf16>, vector<8x128xf32> -> vector<8x128xf32>
    %4 = vector.broadcast %2 : vector<1x128xf32> to vector<8x128xf32>
    %5 = arith.addf %3, %4 : vector<8x128xf32>
    %cst_5 = arith.constant 0.000000e+00 : f32
    %6 = vector.broadcast %cst_5 : f32 to vector<8x128xf32>
    %7 = arith.maximumf %5, %6 : vector<8x128xf32>
    %c0_6 = arith.constant 0 : index
    %c0_7 = arith.constant 0 : index
    %8 = vector.load %arg4[%c0_6, %c0_7] : memref<128x128xbf16, #tpu.memory_space<vmem>>, vector<128x128xbf16>
    %c0_8 = arith.constant 0 : index
    %c0_9 = arith.constant 0 : index
    %9 = vector.load %arg5[%c0_8, %c0_9] : memref<1x128xf32, #tpu.memory_space<vmem>>, vector<1x128xf32>
    %10 = arith.truncf %7 : vector<8x128xf32> to vector<8x128xbf16>
    %cst_10 = arith.constant dense<0.000000e+00> : vector<8x128xf32>
    %11 = tpu.matmul %10, %8, %cst_10 {dimension_numbers = #tpu.dot_dimension_numbers<[1], [0], [0], [1], [0, 0, 1, 1], [], []>} : vector<8x128xbf16>, vector<128x128xbf16>, vector<8x128xf32> -> vector<8x128xf32>
    %12 = vector.broadcast %9 : vector<1x128xf32> to vector<8x128xf32>
    %13 = arith.addf %11, %12 : vector<8x128xf32>
    %cst_11 = arith.constant 0.000000e+00 : f32
    %14 = vector.broadcast %cst_11 : f32 to vector<8x128xf32>
    %15 = arith.maximumf %13, %14 : vector<8x128xf32>
    %c0_12 = arith.constant 0 : index
    %c0_13 = arith.constant 0 : index
    %16 = vector.load %arg6[%c0_12, %c0_13] : memref<128x128xbf16, #tpu.memory_space<vmem>>, vector<128x128xbf16>
    %c0_14 = arith.constant 0 : index
    %c0_15 = arith.constant 0 : index
    %17 = vector.load %arg7[%c0_14, %c0_15] : memref<1x128xf32, #tpu.memory_space<vmem>>, vector<1x128xf32>
    %18 = arith.truncf %15 : vector<8x128xf32> to vector<8x128xbf16>
    %cst_16 = arith.constant dense<0.000000e+00> : vector<8x128xf32>
    %19 = tpu.matmul %18, %16, %cst_16 {dimension_numbers = #tpu.dot_dimension_numbers<[1], [0], [0], [1], [0, 0, 1, 1], [], []>} : vector<8x128xbf16>, vector<128x128xbf16>, vector<8x128xf32> -> vector<8x128xf32>
    %20 = vector.broadcast %17 : vector<1x128xf32> to vector<8x128xf32>
    %21 = arith.addf %19, %20 : vector<8x128xf32>
    %c0_17 = arith.constant 0 : index
    %c0_18 = arith.constant 0 : index
    %22 = vector.load %arg8[%c0_17, %c0_18] : memref<8x128xf32, #tpu.memory_space<vmem>>, vector<8x128xf32>
    tpu.vector_store %arg8[%c0_17, %c0_18], %21 {strides = array<i32>} : memref<8x128xf32, #tpu.memory_space<vmem>>, vector<8x128xf32>,
    return
  }
  func.func @transform_0(%arg0: i32) -> (i32, i32) {
    %c0_i32 = arith.constant 0 : i32
    %c0_i32_0 = arith.constant 0 : i32
    return %arg0, %c0_i32 : i32, i32
  }
  func.func @transform_1(%arg0: i32) -> (i32, i32) {
    %c0_i32 = arith.constant 0 : i32
    %c0_i32_0 = arith.constant 0 : i32
    %c0_i32_1 = arith.constant 0 : i32
    return %c0_i32, %c0_i32_0 : i32, i32
  }
  func.func @transform_2(%arg0: i32) -> (i32, i32) {
    %c0_i32 = arith.constant 0 : i32
    %c0_i32_0 = arith.constant 0 : i32
    %c0_i32_1 = arith.constant 0 : i32
    return %c0_i32, %c0_i32_0 : i32, i32
  }
  func.func @transform_3(%arg0: i32) -> (i32, i32) {
    %c0_i32 = arith.constant 0 : i32
    %c0_i32_0 = arith.constant 0 : i32
    %c0_i32_1 = arith.constant 0 : i32
    return %c0_i32, %c0_i32_0 : i32, i32
  }
  func.func @transform_4(%arg0: i32) -> (i32, i32) {
    %c0_i32 = arith.constant 0 : i32
    %c0_i32_0 = arith.constant 0 : i32
    %c0_i32_1 = arith.constant 0 : i32
    return %c0_i32, %c0_i32_0 : i32, i32
  }
  func.func @transform_5(%arg0: i32) -> (i32, i32) {
    %c0_i32 = arith.constant 0 : i32
    %c0_i32_0 = arith.constant 0 : i32
    %c0_i32_1 = arith.constant 0 : i32
    return %c0_i32, %c0_i32_0 : i32, i32
  }
  func.func @transform_6(%arg0: i32) -> (i32, i32) {
    %c0_i32 = arith.constant 0 : i32
    %c0_i32_0 = arith.constant 0 : i32
    %c0_i32_1 = arith.constant 0 : i32
    return %c0_i32, %c0_i32_0 : i32, i32
  }
  func.func @transform_7(%arg0: i32) -> (i32, i32) {
    %c0_i32 = arith.constant 0 : i32
    %c0_i32_0 = arith.constant 0 : i32
    return %arg0, %c0_i32 : i32, i32
  }
}

module attributes {stable_mosaic.version = 11 : i64} {
  func.func @kernel(%arg0: i32, %arg1: memref<8x128xbf16, #tpu.memory_space<vmem>>, %arg2: memref<128x128xbf16, #tpu.memory_space<vmem>>, %arg3: memref<1x128xf32, #tpu.memory_space<vmem>>, %arg4: memref<128x128xbf16, #tpu.memory_space<vmem>>, %arg5: memref<1x128xf32, #tpu.memory_space<vmem>>, %arg6: memref<128x128xbf16, #tpu.memory_space<vmem>>, %arg7: memref<1x128xf32, #tpu.memory_space<vmem>>, %arg8: memref<8x128xf32, #tpu.memory_space<vmem>>) attributes {dimension_semantics = [#tpu.dimension_semantics<parallel>], iteration_bounds = array<i64: 1>, scalar_prefetch = 0 : i64, scratch_operands = 0 : i64, tpu.core_type = #tpu.core_type<tc>, window_params = [{transform_indices = @transform_0, window_bounds = array<i64: 8, 128>}, {pipeline_mode = #tpu.pipeline_mode<synchronous>, transform_indices = @transform_1, window_bounds = array<i64: 128, 128>}, {pipeline_mode = #tpu.pipeline_mode<synchronous>, transform_indices = @transform_2, window_bounds = array<i64: 1, 128>}, {pipeline_mode = #tpu.pipeline_mode<synchronous>, transform_indices = @transform_3, window_bounds = array<i64: 128, 128>}, {pipeline_mode = #tpu.pipeline_mode<synchronous>, transform_indices = @transform_4, window_bounds = array<i64: 1, 128>}, {pipeline_mode = #tpu.pipeline_mode<synchronous>, transform_indices = @transform_5, window_bounds = array<i64: 128, 128>}, {pipeline_mode = #tpu.pipeline_mode<synchronous>, transform_indices = @transform_6, window_bounds = array<i64: 1, 128>}, {transform_indices = @transform_7, window_bounds = array<i64: 8, 128>}]} {
    %c0 = arith.constant 0 : index
    %c0_0 = arith.constant 0 : index
    %0 = vector.load %arg1[%c0, %c0_0] : memref<8x128xbf16, #tpu.memory_space<vmem>>, vector<8x128xbf16>
    %c0_1 = arith.constant 0 : index
    %c0_2 = arith.constant 0 : index
    %1 = vector.load %arg2[%c0_1, %c0_2] : memref<128x128xbf16, #tpu.memory_space<vmem>>, vector<128x128xbf16>
    %c0_3 = arith.constant 0 : index
    %c0_4 = arith.constant 0 : index
    %2 = vector.load %arg3[%c0_3, %c0_4] : memref<1x128xf32, #tpu.memory_space<vmem>>, vector<1x128xf32>
    %cst = arith.constant dense<0.000000e+00> : vector<8x128xf32>
    %3 = tpu.matmul %0, %1, %cst {dimension_numbers = #tpu.dot_dimension_numbers<[1], [0], [0], [1], [0, 0, 1, 1], [], []>} : vector<8x128xbf16>, vector<128x128xbf16>, vector<8x128xf32> -> vector<8x128xf32>
    %4 = vector.broadcast %2 : vector<1x128xf32> to vector<8x128xf32>
    %5 = arith.addf %3, %4 : vector<8x128xf32>
    %cst_5 = arith.constant 0.000000e+00 : f32
    %6 = vector.broadcast %cst_5 : f32 to vector<8x128xf32>
    %7 = arith.maximumf %5, %6 : vector<8x128xf32>
    %c0_6 = arith.constant 0 : index
    %c0_7 = arith.constant 0 : index
    %8 = vector.load %arg4[%c0_6, %c0_7] : memref<128x128xbf16, #tpu.memory_space<vmem>>, vector<128x128xbf16>
    %c0_8 = arith.constant 0 : index
    %c0_9 = arith.constant 0 : index
    %9 = vector.load %arg5[%c0_8, %c0_9] : memref<1x128xf32, #tpu.memory_space<vmem>>, vector<1x128xf32>
    %10 = arith.truncf %7 : vector<8x128xf32> to vector<8x128xbf16>
    %cst_10 = arith.constant dense<0.000000e+00> : vector<8x128xf32>
    %11 = tpu.matmul %10, %8, %cst_10 {dimension_numbers = #tpu.dot_dimension_numbers<[1], [0], [0], [1], [0, 0, 1, 1], [], []>} : vector<8x128xbf16>, vector<128x128xbf16>, vector<8x128xf32> -> vector<8x128xf32>
    %12 = vector.broadcast %9 : vector<1x128xf32> to vector<8x128xf32>
    %13 = arith.addf %11, %12 : vector<8x128xf32>
    %cst_11 = arith.constant 0.000000e+00 : f32
    %14 = vector.broadcast %cst_11 : f32 to vector<8x128xf32>
    %15 = arith.maximumf %13, %14 : vector<8x128xf32>
    %c0_12 = arith.constant 0 : index
    %c0_13 = arith.constant 0 : index
    %16 = vector.load %arg6[%c0_12, %c0_13] : memref<128x128xbf16, #tpu.memory_space<vmem>>, vector<128x128xbf16>
    %c0_14 = arith.constant 0 : index
    %c0_15 = arith.constant 0 : index
    %17 = vector.load %arg7[%c0_14, %c0_15] : memref<1x128xf32, #tpu.memory_space<vmem>>, vector<1x128xf32>
    %18 = arith.truncf %15 : vector<8x128xf32> to vector<8x128xbf16>
    %cst_16 = arith.constant dense<0.000000e+00> : vector<8x128xf32>
    %19 = tpu.matmul %18, %16, %cst_16 {dimension_numbers = #tpu.dot_dimension_numbers<[1], [0], [0], [1], [0, 0, 1, 1], [], []>} : vector<8x128xbf16>, vector<128x128xbf16>, vector<8x128xf32> -> vector<8x128xf32>
    %20 = vector.broadcast %17 : vector<1x128xf32> to vector<8x128xf32>
    %21 = arith.addf %19, %20 : vector<8x128xf32>
    %c0_17 = arith.constant 0 : index
    %c0_18 = arith.constant 0 : index
    %22 = vector.load %arg8[%c0_17, %c0_18] : memref<8x128xf32, #tpu.memory_space<vmem>>, vector<8x128xf32>
    tpu.vector_store %arg8[%c0_17, %c0_18], %21 {strides = array<i32>} : memref<8x128xf32, #tpu.memory_space<vmem>>, vector<8x128xf32>,
    return
  }
  func.func @transform_0(%arg0: i32) -> (i32, i32) {
    %c0_i32 = arith.constant 0 : i32
    %c0_i32_0 = arith.constant 0 : i32
    return %arg0, %c0_i32 : i32, i32
  }
  func.func @transform_1(%arg0: i32) -> (i32, i32) {
    %c0_i32 = arith.constant 0 : i32
    %c0_i32_0 = arith.constant 0 : i32
    %c0_i32_1 = arith.constant 0 : i32
    return %c0_i32, %c0_i32_0 : i32, i32
  }
  func.func @transform_2(%arg0: i32) -> (i32, i32) {
    %c0_i32 = arith.constant 0 : i32
    %c0_i32_0 = arith.constant 0 : i32
    %c0_i32_1 = arith.constant 0 : i32
    return %c0_i32, %c0_i32_0 : i32, i32
  }
  func.func @transform_3(%arg0: i32) -> (i32, i32) {
    %c0_i32 = arith.constant 0 : i32
    %c0_i32_0 = arith.constant 0 : i32
    %c0_i32_1 = arith.constant 0 : i32
    return %c0_i32, %c0_i32_0 : i32, i32
  }
  func.func @transform_4(%arg0: i32) -> (i32, i32) {
    %c0_i32 = arith.constant 0 : i32
    %c0_i32_0 = arith.constant 0 : i32
    %c0_i32_1 = arith.constant 0 : i32
    return %c0_i32, %c0_i32_0 : i32, i32
  }
  func.func @transform_5(%arg0: i32) -> (i32, i32) {
    %c0_i32 = arith.constant 0 : i32
    %c0_i32_0 = arith.constant 0 : i32
    %c0_i32_1 = arith.constant 0 : i32
    return %c0_i32, %c0_i32_0 : i32, i32
  }
  func.func @transform_6(%arg0: i32) -> (i32, i32) {
    %c0_i32 = arith.constant 0 : i32
    %c0_i32_0 = arith.constant 0 : i32
    %c0_i32_1 = arith.constant 0 : i32
    return %c0_i32, %c0_i32_0 : i32, i32
  }
  func.func @transform_7(%arg0: i32) -> (i32, i32) {
    %c0_i32 = arith.constant 0 : i32
    %c0_i32_0 = arith.constant 0 : i32
    return %arg0, %c0_i32 : i32, i32
  }
}

</mosaic_0001>

<llo_original>
// kernel: encoder_forward.1
$region0: #{encoder_forward.1}
  #allocation0 [shape = 'u32[]', space=smem, size = 0x4, offset = 0x4, fixed_abs, tag = 'smem constant byte address 0x4 - core index']
  #allocation1 [shape = 'u32[72,128]{1,0:T(1,128)}', space=vmem, size = 0x9000, scoped, tag = 'internal scratch']
  %s0 = inlined_call_operand.vmem [shape: bf16[8,128], index: 0, kind: input, shape index: {}]
  %s1 = inlined_call_operand.hbm [shape: bf16[128,128], index: 1, kind: input, shape index: {}]
  %s2 = inlined_call_operand.vmem [shape: f32[1,128], index: 2, kind: input, shape index: {}]
  %s3 = inlined_call_operand.hbm [shape: bf16[128,128], index: 3, kind: input, shape index: {}]
  %s4 = inlined_call_operand.vmem [shape: f32[1,128], index: 4, kind: input, shape index: {}]
  %s5 = inlined_call_operand.hbm [shape: bf16[128,128], index: 5, kind: input, shape index: {}]
  %s6 = inlined_call_operand.vmem [shape: f32[1,128], index: 6, kind: input, shape index: {}]
  %s7 = inlined_call_operand.vmem [shape: f32[8,128], index: 7, kind: output, shape index: {}]
  %s8 = sld [smem:[#allocation0]]
  $region50: #{encoder_forward.1} parent=0
    _
  %s10 = ssub.s32 1, %s8
  %s11 = scalar_select 0, %s10, %s8
  $region1: #{encoder_forward.1} parent=0
    #allocation2 [shape = 'u8[32768]{0}', space=vmem, size = 0x8000, scoped, tag = 'input window, operand 1, single buffered']
    #allocation3 [shape = 's32[1]{0}', space=sflag, size = 0x4, scoped, tag = 'scoped memory for encoder_forward.1']
    #allocation4 [shape = 'u8[32768]{0}', space=vmem, size = 0x8000, scoped, tag = 'input window, operand 3, single buffered']
    #allocation5 [shape = 's32[1]{0}', space=sflag, size = 0x4, scoped, tag = 'scoped memory for encoder_forward.1']
    #allocation6 [shape = 'u8[32768]{0}', space=vmem, size = 0x8000, scoped, tag = 'input window, operand 5, single buffered']
    %12 = vsyncpa [#allocation3], 0
    %13 = vsyncpa [#allocation5], 0
    // Predicated region
    $region2: #{encoder_forward.1} parent=1 // pred_check
      _
    $region3: #{encoder_forward.1} parent=1 // pred_check_branch
      %15 = sbr.rel (0) target = $region5
    $region4: #{encoder_forward.1} parent=1 // pred_region
      _
    $region5: #{encoder_forward.1} parent=1 // pred_fallthru
      _
    // Predicated region
    $region6: #{encoder_forward.1} parent=1 // pred_check
      _
    $region7: #{encoder_forward.1} parent=1 // pred_check_branch
      %17 = sbr.rel (0) target = $region9
    $region8: #{encoder_forward.1} parent=1 // pred_region
      %19 = vsyncadd [#allocation3], 0
      %s20 = sshll.u32 %s1, 4
      %s21 = int_to_ptr.hbm [resolvable:$true] %s20
      %s22 = sshll.u32 [#allocation2], 4
      %s23 = int_to_ptr.vmem [resolvable:$true] %s22
      %28 = dma.hbm_to_vmem [thread:$0]  %s21, 1024, %s23, [#allocation3], 64, 64, 4
    $region9: #{encoder_forward.1} parent=1 // pred_fallthru
      _
    // Predicated region
    $region10: #{encoder_forward.1} parent=1 // pred_check
      _
    $region11: #{encoder_forward.1} parent=1 // pred_check_branch
      %30 = sbr.rel (0) target = $region13
    $region12: #{encoder_forward.1} parent=1 // pred_region
      _
    $region13: #{encoder_forward.1} parent=1 // pred_fallthru
      _
    // Predicated region
    $region14: #{encoder_forward.1} parent=1 // pred_check
      _
    $region15: #{encoder_forward.1} parent=1 // pred_check_branch
      %32 = sbr.rel (0) target = $region17
    $region16: #{encoder_forward.1} parent=1 // pred_region
      %34 = vsyncadd [#allocation5], 0
      %s35 = sshll.u32 %s3, 4
      %s36 = int_to_ptr.hbm [resolvable:$true] %s35
      %s37 = sshll.u32 [#allocation4], 4
      %s38 = int_to_ptr.vmem [resolvable:$true] %s37
      %43 = dma.hbm_to_vmem [thread:$0]  %s36, 1024, %s38, [#allocation5], 64, 64, 4
    $region17: #{encoder_forward.1} parent=1 // pred_fallthru
      _
    // Predicated region
    $region18: #{encoder_forward.1} parent=1 // pred_check
      _
    $region19: #{encoder_forward.1} parent=1 // pred_check_branch
      %45 = sbr.rel (0) target = $region21
    $region20: #{encoder_forward.1} parent=1 // pred_region
      _
    $region21: #{encoder_forward.1} parent=1 // pred_fallthru
      _
    // Predicated region
    $region22: #{encoder_forward.1} parent=1 // pred_check
      _
    $region23: #{encoder_forward.1} parent=1 // pred_check_branch
      %47 = sbr.rel (0) target = $region25
    $region24: #{encoder_forward.1} parent=1 // pred_region
      %49 = vsyncadd [#allocation5], 0
      %s50 = sshll.u32 %s5, 4
      %s51 = int_to_ptr.hbm [resolvable:$true] %s50
      %s52 = sshll.u32 [#allocation6], 4
      %s53 = int_to_ptr.vmem [resolvable:$true] %s52
      %58 = dma.hbm_to_vmem [thread:$0]  %s51, 1024, %s53, [#allocation5], 64, 64, 4
    $region25: #{encoder_forward.1} parent=1 // pred_fallthru
      _
    // Predicated region
    $region26: #{encoder_forward.1} parent=1 // pred_check
      _
    $region27: #{encoder_forward.1} parent=1 // pred_check_branch
      %60 = sbr.rel (0) target = $region29
    $region28: #{encoder_forward.1} parent=1 // pred_region
      _
    $region29: #{encoder_forward.1} parent=1 // pred_fallthru
      _
    // Predicated region
    $region30: #{encoder_forward.1} parent=1 // pred_check
      _
    $region31: #{encoder_forward.1} parent=1 // pred_check_branch
      %62 = sbr.rel (0) target = $region33
    $region32: #{encoder_forward.1} parent=1 // pred_region
      %64 = dma.done [#allocation3], 1024
    $region33: #{encoder_forward.1} parent=1 // pred_fallthru
      _
    // Predicated region
    $region34: #{encoder_forward.1} parent=1 // pred_check
      _
    $region35: #{encoder_forward.1} parent=1 // pred_check_branch
      %66 = sbr.rel (0) target = $region37
    $region36: #{encoder_forward.1} parent=1 // pred_region
      %68 = dma.done [#allocation5], 1024
    $region37: #{encoder_forward.1} parent=1 // pred_fallthru
      _
    // Predicated region
    $region38: #{encoder_forward.1} parent=1 // pred_check
      _
    $region39: #{encoder_forward.1} parent=1 // pred_check_branch
      %70 = sbr.rel (0) target = $region41
    $region40: #{encoder_forward.1} parent=1 // pred_region
      %72 = dma.done [#allocation5], 1024
    $region41: #{encoder_forward.1} parent=1 // pred_fallthru
      _
    %v73 = vld [vmem:[%s0] sm:$0xf]
    %v74 = vld [vmem:[#allocation2] sm:$0xf]
    %v75 = vld [vmem:[#allocation2 + $0x4] sm:$0xf]
    %v76 = vld [vmem:[#allocation2 + $0x8] sm:$0xf]
    %v77 = vld [vmem:[#allocation2 + $0xc] sm:$0xf]
    %v78 = vld [vmem:[#allocation2 + $0x10] sm:$0xf]
    %v79 = vld [vmem:[#allocation2 + $0x14] sm:$0xf]
    %v80 = vld [vmem:[#allocation2 + $0x18] sm:$0xf]
    %v81 = vld [vmem:[#allocation2 + $0x1c] sm:$0xf]
    %v82 = vld [vmem:[#allocation2 + $0x20] sm:$0xf]
    %v83 = vld [vmem:[#allocation2 + $0x24] sm:$0xf]
    %v84 = vld [vmem:[#allocation2 + $0x28] sm:$0xf]
    %v85 = vld [vmem:[#allocation2 + $0x2c] sm:$0xf]
    %v86 = vld [vmem:[#allocation2 + $0x30] sm:$0xf]
    %v87 = vld [vmem:[#allocation2 + $0x34] sm:$0xf]
    %v88 = vld [vmem:[#allocation2 + $0x38] sm:$0xf]
    %v89 = vld [vmem:[#allocation2 + $0x3c] sm:$0xf]
    %v90 = vld [vmem:[%s2] sm:$0x1]
    %v92 = vperm.slane %v90, 0
    %v110 = vunpack.c.l.b16 %v74
    %v111 = vunpack.c.l.b16 %v75
    %v112 = vunpack.c.l.b16 %v76
    %v113 = vunpack.c.l.b16 %v77
    %v114 = vunpack.c.l.b16 %v78
    %v115 = vunpack.c.l.b16 %v79
    %v116 = vunpack.c.l.b16 %v80
    %v117 = vunpack.c.l.b16 %v81
    %v118 = vunpack.c.l.b16 %v82
    %v119 = vunpack.c.l.b16 %v83
    %v120 = vunpack.c.l.b16 %v84
    %v121 = vunpack.c.l.b16 %v85
    %v122 = vunpack.c.l.b16 %v86
    %v123 = vunpack.c.l.b16 %v87
    %v124 = vunpack.c.l.b16 %v88
    %v125 = vunpack.c.l.b16 %v89
    %v126 = vpack.c.b16 %v111, %v110
    %v127 = vpack.c.b16 %v113, %v112
    %v128 = vpack.c.b16 %v115, %v114
    %v129 = vpack.c.b16 %v117, %v116
    %v130 = vpack.c.b16 %v119, %v118
    %v131 = vpack.c.b16 %v121, %v120
    %v132 = vpack.c.b16 %v123, %v122
    %v133 = vpack.c.b16 %v125, %v124
    %142 = vmatpush.bf16.msra.mxu0 %v133
    %143 = vmatpush.bf16.msra.mxu0 %v132
    %144 = vmatpush.bf16.msra.mxu0 %v131
    %145 = vmatpush.bf16.msra.mxu0 %v130
    %146 = vmatpush.bf16.msra.mxu0 %v129
    %147 = vmatpush.bf16.msra.mxu0 %v128
    %148 = vmatpush.bf16.msra.mxu0 %v127
    %149 = vmatpush.bf16.msra.mxu0 %v126
    %150 = vmatmul.bf16.gmra.mxu0 %v73
    %v151 = vpop.f32.mrf.mxu0
    %v152 = vadd.f32 %v92, %v151
    %v153 = vpop.f32.mrf.mxu0
    %154 = vdwg.mxu0
    %v155 = vmax.f32 %v152, 0.0
    %v156 = vld [vmem:[#allocation4] sm:$0xf]
    %v157 = vld [vmem:[#allocation4 + $0x4] sm:$0xf]
    %v158 = vld [vmem:[#allocation4 + $0x8] sm:$0xf]
    %v159 = vld [vmem:[#allocation4 + $0xc] sm:$0xf]
    %v160 = vld [vmem:[#allocation4 + $0x10] sm:$0xf]
    %v161 = vld [vmem:[#allocation4 + $0x14] sm:$0xf]
    %v162 = vld [vmem:[#allocation4 + $0x18] sm:$0xf]
    %v163 = vld [vmem:[#allocation4 + $0x1c] sm:$0xf]
    %v164 = vld [vmem:[#allocation4 + $0x20] sm:$0xf]
    %v165 = vld [vmem:[#allocation4 + $0x24] sm:$0xf]
    %v166 = vld [vmem:[#allocation4 + $0x28] sm:$0xf]
    %v167 = vld [vmem:[#allocation4 + $0x2c] sm:$0xf]
    %v168 = vld [vmem:[#allocation4 + $0x30] sm:$0xf]
    %v169 = vld [vmem:[#allocation4 + $0x34] sm:$0xf]
    %v170 = vld [vmem:[#allocation4 + $0x38] sm:$0xf]
    %v171 = vld [vmem:[#allocation4 + $0x3c] sm:$0xf]
    %v172 = vld [vmem:[%s4] sm:$0x1]
    %v173 = vpack.c.bf16 %v155, %v155
    %v175 = vperm.slane %v172, 0
    %v193 = vunpack.c.l.b16 %v156
    %v194 = vunpack.c.l.b16 %v157
    %v195 = vunpack.c.l.b16 %v158
    %v196 = vunpack.c.l.b16 %v159
    %v197 = vunpack.c.l.b16 %v160
    %v198 = vunpack.c.l.b16 %v161
    %v199 = vunpack.c.l.b16 %v162
    %v200 = vunpack.c.l.b16 %v163
    %v201 = vunpack.c.l.b16 %v164
    %v202 = vunpack.c.l.b16 %v165
    %v203 = vunpack.c.l.b16 %v166
    %v204 = vunpack.c.l.b16 %v167
    %v205 = vunpack.c.l.b16 %v168
    %v206 = vunpack.c.l.b16 %v169
    %v207 = vunpack.c.l.b16 %v170
    %v208 = vunpack.c.l.b16 %v171
    %v209 = vpack.c.b16 %v194, %v193
    %v210 = vpack.c.b16 %v196, %v195
    %v211 = vpack.c.b16 %v198, %v197
    %v212 = vpack.c.b16 %v200, %v199
    %v213 = vpack.c.b16 %v202, %v201
    %v214 = vpack.c.b16 %v204, %v203
    %v215 = vpack.c.b16 %v206, %v205
    %v216 = vpack.c.b16 %v208, %v207
    %225 = vmatpush.bf16.msra.mxu0 %v216
    %226 = vmatpush.bf16.msra.mxu0 %v215
    %227 = vmatpush.bf16.msra.mxu0 %v214
    %228 = vmatpush.bf16.msra.mxu0 %v213
    %229 = vmatpush.bf16.msra.mxu0 %v212
    %230 = vmatpush.bf16.msra.mxu0 %v211
    %231 = vmatpush.bf16.msra.mxu0 %v210
    %232 = vmatpush.bf16.msra.mxu0 %v209
    %233 = vmatmul.bf16.gmra.mxu0 %v173
    %v234 = vpop.f32.mrf.mxu0
    %v235 = vadd.f32 %v175, %v234
    %v236 = vpop.f32.mrf.mxu0
    %237 = vdwg.mxu0
    %v238 = vmax.f32 %v235, 0.0
    %v239 = vld [vmem:[#allocation6] sm:$0xf]
    %v240 = vld [vmem:[#allocation6 + $0x4] sm:$0xf]
    %v241 = vld [vmem:[#allocation6 + $0x8] sm:$0xf]
    %v242 = vld [vmem:[#allocation6 + $0xc] sm:$0xf]
    %v243 = vld [vmem:[#allocation6 + $0x10] sm:$0xf]
    %v244 = vld [vmem:[#allocation6 + $0x14] sm:$0xf]
    %v245 = vld [vmem:[#allocation6 + $0x18] sm:$0xf]
    %v246 = vld [vmem:[#allocation6 + $0x1c] sm:$0xf]
    %v247 = vld [vmem:[#allocation6 + $0x20] sm:$0xf]
    %v248 = vld [vmem:[#allocation6 + $0x24] sm:$0xf]
    %v249 = vld [vmem:[#allocation6 + $0x28] sm:$0xf]
    %v250 = vld [vmem:[#allocation6 + $0x2c] sm:$0xf]
    %v251 = vld [vmem:[#allocation6 + $0x30] sm:$0xf]
    %v252 = vld [vmem:[#allocation6 + $0x34] sm:$0xf]
    %v253 = vld [vmem:[#allocation6 + $0x38] sm:$0xf]
    %v254 = vld [vmem:[#allocation6 + $0x3c] sm:$0xf]
    %v255 = vld [vmem:[%s6] sm:$0x1]
    %v256 = vpack.c.bf16 %v238, %v238
    %v258 = vperm.slane %v255, 0
    %v276 = vunpack.c.l.b16 %v239
    %v277 = vunpack.c.l.b16 %v240
    %v278 = vunpack.c.l.b16 %v241
    %v279 = vunpack.c.l.b16 %v242
    %v280 = vunpack.c.l.b16 %v243
    %v281 = vunpack.c.l.b16 %v244
    %v282 = vunpack.c.l.b16 %v245
    %v283 = vunpack.c.l.b16 %v246
    %v284 = vunpack.c.l.b16 %v247
    %v285 = vunpack.c.l.b16 %v248
    %v286 = vunpack.c.l.b16 %v249
    %v287 = vunpack.c.l.b16 %v250
    %v288 = vunpack.c.l.b16 %v251
    %v289 = vunpack.c.l.b16 %v252
    %v290 = vunpack.c.l.b16 %v253
    %v291 = vunpack.c.l.b16 %v254
    %v292 = vpack.c.b16 %v277, %v276
    %v293 = vpack.c.b16 %v279, %v278
    %v294 = vpack.c.b16 %v281, %v280
    %v295 = vpack.c.b16 %v283, %v282
    %v296 = vpack.c.b16 %v285, %v284
    %v297 = vpack.c.b16 %v287, %v286
    %v298 = vpack.c.b16 %v289, %v288
    %v299 = vpack.c.b16 %v291, %v290
    %308 = vmatpush.bf16.msra.mxu0 %v299
    %309 = vmatpush.bf16.msra.mxu0 %v298
    %310 = vmatpush.bf16.msra.mxu0 %v297
    %311 = vmatpush.bf16.msra.mxu0 %v296
    %312 = vmatpush.bf16.msra.mxu0 %v295
    %313 = vmatpush.bf16.msra.mxu0 %v294
    %314 = vmatpush.bf16.msra.mxu0 %v293
    %315 = vmatpush.bf16.msra.mxu0 %v292
    %316 = vmatmul.bf16.gmra.mxu0 %v256
    %v317 = vpop.f32.mrf.mxu0
    %v318 = vadd.f32 %v258, %v317
    %v319 = vpop.f32.mrf.mxu0
    %320 = vdwg.mxu0
    %321 = vst [vmem:[%s7] sm:$0xff] %v318
    // Predicated region
    $region42: #{encoder_forward.1} parent=1 // pred_check
      _
    $region43: #{encoder_forward.1} parent=1 // pred_check_branch
      %323 = sbr.rel (0) target = $region45
    $region44: #{encoder_forward.1} parent=1 // pred_region
      _
    $region45: #{encoder_forward.1} parent=1 // pred_fallthru
      _
    // Predicated region
    $region46: #{encoder_forward.1} parent=1 // pred_check
      _
    $region47: #{encoder_forward.1} parent=1 // pred_check_branch
      %325 = sbr.rel (0) target = $region49
    $region48: #{encoder_forward.1} parent=1 // pred_region
      _
    $region49: #{encoder_forward.1} parent=1 // pred_fallthru
      _
    %326 = vsyncpa [#allocation3], 1
    %327 = vsyncpa [#allocation5], 1

// kernel: encoder_forward.1
$region0: #{encoder_forward.1}
  #allocation0 [shape = 'u32[]', space=smem, size = 0x4, offset = 0x4, fixed_abs, tag = 'smem constant byte address 0x4 - core index']
  #allocation1 [shape = 'u32[72,128]{1,0:T(1,128)}', space=vmem, size = 0x9000, scoped, tag = 'internal scratch']
  %s0 = inlined_call_operand.vmem [shape: bf16[8,128], index: 0, kind: input, shape index: {}]
  %s1 = inlined_call_operand.hbm [shape: bf16[128,128], index: 1, kind: input, shape index: {}]
  %s2 = inlined_call_operand.vmem [shape: f32[1,128], index: 2, kind: input, shape index: {}]
  %s3 = inlined_call_operand.hbm [shape: bf16[128,128], index: 3, kind: input, shape index: {}]
  %s4 = inlined_call_operand.vmem [shape: f32[1,128], index: 4, kind: input, shape index: {}]
  %s5 = inlined_call_operand.hbm [shape: bf16[128,128], index: 5, kind: input, shape index: {}]
  %s6 = inlined_call_operand.vmem [shape: f32[1,128], index: 6, kind: input, shape index: {}]
  %s7 = inlined_call_operand.vmem [shape: f32[8,128], index: 7, kind: output, shape index: {}]
  %s8 = sld [smem:[#allocation0]]
  $region50: #{encoder_forward.1} parent=0
    _
  %s10 = ssub.s32 1, %s8
  %s11 = scalar_select 0, %s10, %s8
  $region1: #{encoder_forward.1} parent=0
    #allocation2 [shape = 'u8[32768]{0}', space=vmem, size = 0x8000, scoped, tag = 'input window, operand 1, single buffered']
    #allocation3 [shape = 's32[1]{0}', space=sflag, size = 0x4, scoped, tag = 'scoped memory for encoder_forward.1']
    #allocation4 [shape = 'u8[32768]{0}', space=vmem, size = 0x8000, scoped, tag = 'input window, operand 3, single buffered']
    #allocation5 [shape = 's32[1]{0}', space=sflag, size = 0x4, scoped, tag = 'scoped memory for encoder_forward.1']
    #allocation6 [shape = 'u8[32768]{0}', space=vmem, size = 0x8000, scoped, tag = 'input window, operand 5, single buffered']
    %12 = vsyncpa [#allocation3], 0
    %13 = vsyncpa [#allocation5], 0
    // Predicated region
    $region2: #{encoder_forward.1} parent=1 // pred_check
      _
    $region3: #{encoder_forward.1} parent=1 // pred_check_branch
      %15 = sbr.rel (0) target = $region5
    $region4: #{encoder_forward.1} parent=1 // pred_region
      _
    $region5: #{encoder_forward.1} parent=1 // pred_fallthru
      _
    // Predicated region
    $region6: #{encoder_forward.1} parent=1 // pred_check
      _
    $region7: #{encoder_forward.1} parent=1 // pred_check_branch
      %17 = sbr.rel (0) target = $region9
    $region8: #{encoder_forward.1} parent=1 // pred_region
      %19 = vsyncadd [#allocation3], 0
      %s20 = sshll.u32 %s1, 4
      %s21 = int_to_ptr.hbm [resolvable:$true] %s20
      %s22 = sshll.u32 [#allocation2], 4
      %s23 = int_to_ptr.vmem [resolvable:$true] %s22
      %28 = dma.hbm_to_vmem [thread:$0]  %s21, 1024, %s23, [#allocation3], 64, 64, 4
    $region9: #{encoder_forward.1} parent=1 // pred_fallthru
      _
    // Predicated region
    $region10: #{encoder_forward.1} parent=1 // pred_check
      _
    $region11: #{encoder_forward.1} parent=1 // pred_check_branch
      %30 = sbr.rel (0) target = $region13
    $region12: #{encoder_forward.1} parent=1 // pred_region
      _
    $region13: #{encoder_forward.1} parent=1 // pred_fallthru
      _
    // Predicated region
    $region14: #{encoder_forward.1} parent=1 // pred_check
      _
    $region15: #{encoder_forward.1} parent=1 // pred_check_branch
      %32 = sbr.rel (0) target = $region17
    $region16: #{encoder_forward.1} parent=1 // pred_region
      %34 = vsyncadd [#allocation5], 0
      %s35 = sshll.u32 %s3, 4
      %s36 = int_to_ptr.hbm [resolvable:$true] %s35
      %s37 = sshll.u32 [#allocation4], 4
      %s38 = int_to_ptr.vmem [resolvable:$true] %s37
      %43 = dma.hbm_to_vmem [thread:$0]  %s36, 1024, %s38, [#allocation5], 64, 64, 4
    $region17: #{encoder_forward.1} parent=1 // pred_fallthru
      _
    // Predicated region
    $region18: #{encoder_forward.1} parent=1 // pred_check
      _
    $region19: #{encoder_forward.1} parent=1 // pred_check_branch
      %45 = sbr.rel (0) target = $region21
    $region20: #{encoder_forward.1} parent=1 // pred_region
      _
    $region21: #{encoder_forward.1} parent=1 // pred_fallthru
      _
    // Predicated region
    $region22: #{encoder_forward.1} parent=1 // pred_check
      _
    $region23: #{encoder_forward.1} parent=1 // pred_check_branch
      %47 = sbr.rel (0) target = $region25
    $region24: #{encoder_forward.1} parent=1 // pred_region
      %49 = vsyncadd [#allocation5], 0
      %s50 = sshll.u32 %s5, 4
      %s51 = int_to_ptr.hbm [resolvable:$true] %s50
      %s52 = sshll.u32 [#allocation6], 4
      %s53 = int_to_ptr.vmem [resolvable:$true] %s52
      %58 = dma.hbm_to_vmem [thread:$0]  %s51, 1024, %s53, [#allocation5], 64, 64, 4
    $region25: #{encoder_forward.1} parent=1 // pred_fallthru
      _
    // Predicated region
    $region26: #{encoder_forward.1} parent=1 // pred_check
      _
    $region27: #{encoder_forward.1} parent=1 // pred_check_branch
      %60 = sbr.rel (0) target = $region29
    $region28: #{encoder_forward.1} parent=1 // pred_region
      _
    $region29: #{encoder_forward.1} parent=1 // pred_fallthru
      _
    // Predicated region
    $region30: #{encoder_forward.1} parent=1 // pred_check
      _
    $region31: #{encoder_forward.1} parent=1 // pred_check_branch
      %62 = sbr.rel (0) target = $region33
    $region32: #{encoder_forward.1} parent=1 // pred_region
      %64 = dma.done [#allocation3], 1024
    $region33: #{encoder_forward.1} parent=1 // pred_fallthru
      _
    // Predicated region
    $region34: #{encoder_forward.1} parent=1 // pred_check
      _
    $region35: #{encoder_forward.1} parent=1 // pred_check_branch
      %66 = sbr.rel (0) target = $region37
    $region36: #{encoder_forward.1} parent=1 // pred_region
      %68 = dma.done [#allocation5], 1024
    $region37: #{encoder_forward.1} parent=1 // pred_fallthru
      _
    // Predicated region
    $region38: #{encoder_forward.1} parent=1 // pred_check
      _
    $region39: #{encoder_forward.1} parent=1 // pred_check_branch
      %70 = sbr.rel (0) target = $region41
    $region40: #{encoder_forward.1} parent=1 // pred_region
      %72 = dma.done [#allocation5], 1024
    $region41: #{encoder_forward.1} parent=1 // pred_fallthru
      _
    %v73 = vld [vmem:[%s0] sm:$0xf]
    %v74 = vld [vmem:[#allocation2] sm:$0xf]
    %v75 = vld [vmem:[#allocation2 + $0x4] sm:$0xf]
    %v76 = vld [vmem:[#allocation2 + $0x8] sm:$0xf]
    %v77 = vld [vmem:[#allocation2 + $0xc] sm:$0xf]
    %v78 = vld [vmem:[#allocation2 + $0x10] sm:$0xf]
    %v79 = vld [vmem:[#allocation2 + $0x14] sm:$0xf]
    %v80 = vld [vmem:[#allocation2 + $0x18] sm:$0xf]
    %v81 = vld [vmem:[#allocation2 + $0x1c] sm:$0xf]
    %v82 = vld [vmem:[#allocation2 + $0x20] sm:$0xf]
    %v83 = vld [vmem:[#allocation2 + $0x24] sm:$0xf]
    %v84 = vld [vmem:[#allocation2 + $0x28] sm:$0xf]
    %v85 = vld [vmem:[#allocation2 + $0x2c] sm:$0xf]
    %v86 = vld [vmem:[#allocation2 + $0x30] sm:$0xf]
    %v87 = vld [vmem:[#allocation2 + $0x34] sm:$0xf]
    %v88 = vld [vmem:[#allocation2 + $0x38] sm:$0xf]
    %v89 = vld [vmem:[#allocation2 + $0x3c] sm:$0xf]
    %v90 = vld [vmem:[%s2] sm:$0x1]
    %v92 = vperm.slane %v90, 0
    %v110 = vunpack.c.l.b16 %v74
    %v111 = vunpack.c.l.b16 %v75
    %v112 = vunpack.c.l.b16 %v76
    %v113 = vunpack.c.l.b16 %v77
    %v114 = vunpack.c.l.b16 %v78
    %v115 = vunpack.c.l.b16 %v79
    %v116 = vunpack.c.l.b16 %v80
    %v117 = vunpack.c.l.b16 %v81
    %v118 = vunpack.c.l.b16 %v82
    %v119 = vunpack.c.l.b16 %v83
    %v120 = vunpack.c.l.b16 %v84
    %v121 = vunpack.c.l.b16 %v85
    %v122 = vunpack.c.l.b16 %v86
    %v123 = vunpack.c.l.b16 %v87
    %v124 = vunpack.c.l.b16 %v88
    %v125 = vunpack.c.l.b16 %v89
    %v126 = vpack.c.b16 %v111, %v110
    %v127 = vpack.c.b16 %v113, %v112
    %v128 = vpack.c.b16 %v115, %v114
    %v129 = vpack.c.b16 %v117, %v116
    %v130 = vpack.c.b16 %v119, %v118
    %v131 = vpack.c.b16 %v121, %v120
    %v132 = vpack.c.b16 %v123, %v122
    %v133 = vpack.c.b16 %v125, %v124
    %142 = vmatpush.bf16.msra.mxu0 %v133
    %143 = vmatpush.bf16.msra.mxu0 %v132
    %144 = vmatpush.bf16.msra.mxu0 %v131
    %145 = vmatpush.bf16.msra.mxu0 %v130
    %146 = vmatpush.bf16.msra.mxu0 %v129
    %147 = vmatpush.bf16.msra.mxu0 %v128
    %148 = vmatpush.bf16.msra.mxu0 %v127
    %149 = vmatpush.bf16.msra.mxu0 %v126
    %150 = vmatmul.bf16.gmra.mxu0 %v73
    %v151 = vpop.f32.mrf.mxu0
    %v152 = vadd.f32 %v92, %v151
    %v153 = vpop.f32.mrf.mxu0
    %154 = vdwg.mxu0
    %v155 = vmax.f32 %v152, 0.0
    %v156 = vld [vmem:[#allocation4] sm:$0xf]
    %v157 = vld [vmem:[#allocation4 + $0x4] sm:$0xf]
    %v158 = vld [vmem:[#allocation4 + $0x8] sm:$0xf]
    %v159 = vld [vmem:[#allocation4 + $0xc] sm:$0xf]
    %v160 = vld [vmem:[#allocation4 + $0x10] sm:$0xf]
    %v161 = vld [vmem:[#allocation4 + $0x14] sm:$0xf]
    %v162 = vld [vmem:[#allocation4 + $0x18] sm:$0xf]
    %v163 = vld [vmem:[#allocation4 + $0x1c] sm:$0xf]
    %v164 = vld [vmem:[#allocation4 + $0x20] sm:$0xf]
    %v165 = vld [vmem:[#allocation4 + $0x24] sm:$0xf]
    %v166 = vld [vmem:[#allocation4 + $0x28] sm:$0xf]
    %v167 = vld [vmem:[#allocation4 + $0x2c] sm:$0xf]
    %v168 = vld [vmem:[#allocation4 + $0x30] sm:$0xf]
    %v169 = vld [vmem:[#allocation4 + $0x34] sm:$0xf]
    %v170 = vld [vmem:[#allocation4 + $0x38] sm:$0xf]
    %v171 = vld [vmem:[#allocation4 + $0x3c] sm:$0xf]
    %v172 = vld [vmem:[%s4] sm:$0x1]
    %v173 = vpack.c.bf16 %v155, %v155
    %v175 = vperm.slane %v172, 0
    %v193 = vunpack.c.l.b16 %v156
    %v194 = vunpack.c.l.b16 %v157
    %v195 = vunpack.c.l.b16 %v158
    %v196 = vunpack.c.l.b16 %v159
    %v197 = vunpack.c.l.b16 %v160
    %v198 = vunpack.c.l.b16 %v161
    %v199 = vunpack.c.l.b16 %v162
    %v200 = vunpack.c.l.b16 %v163
    %v201 = vunpack.c.l.b16 %v164
    %v202 = vunpack.c.l.b16 %v165
    %v203 = vunpack.c.l.b16 %v166
    %v204 = vunpack.c.l.b16 %v167
    %v205 = vunpack.c.l.b16 %v168
    %v206 = vunpack.c.l.b16 %v169
    %v207 = vunpack.c.l.b16 %v170
    %v208 = vunpack.c.l.b16 %v171
    %v209 = vpack.c.b16 %v194, %v193
    %v210 = vpack.c.b16 %v196, %v195
    %v211 = vpack.c.b16 %v198, %v197
    %v212 = vpack.c.b16 %v200, %v199
    %v213 = vpack.c.b16 %v202, %v201
    %v214 = vpack.c.b16 %v204, %v203
    %v215 = vpack.c.b16 %v206, %v205
    %v216 = vpack.c.b16 %v208, %v207
    %225 = vmatpush.bf16.msra.mxu0 %v216
    %226 = vmatpush.bf16.msra.mxu0 %v215
    %227 = vmatpush.bf16.msra.mxu0 %v214
    %228 = vmatpush.bf16.msra.mxu0 %v213
    %229 = vmatpush.bf16.msra.mxu0 %v212
    %230 = vmatpush.bf16.msra.mxu0 %v211
    %231 = vmatpush.bf16.msra.mxu0 %v210
    %232 = vmatpush.bf16.msra.mxu0 %v209
    %233 = vmatmul.bf16.gmra.mxu0 %v173
    %v234 = vpop.f32.mrf.mxu0
    %v235 = vadd.f32 %v175, %v234
    %v236 = vpop.f32.mrf.mxu0
    %237 = vdwg.mxu0
    %v238 = vmax.f32 %v235, 0.0
    %v239 = vld [vmem:[#allocation6] sm:$0xf]
    %v240 = vld [vmem:[#allocation6 + $0x4] sm:$0xf]
    %v241 = vld [vmem:[#allocation6 + $0x8] sm:$0xf]
    %v242 = vld [vmem:[#allocation6 + $0xc] sm:$0xf]
    %v243 = vld [vmem:[#allocation6 + $0x10] sm:$0xf]
    %v244 = vld [vmem:[#allocation6 + $0x14] sm:$0xf]
    %v245 = vld [vmem:[#allocation6 + $0x18] sm:$0xf]
    %v246 = vld [vmem:[#allocation6 + $0x1c] sm:$0xf]
    %v247 = vld [vmem:[#allocation6 + $0x20] sm:$0xf]
    %v248 = vld [vmem:[#allocation6 + $0x24] sm:$0xf]
    %v249 = vld [vmem:[#allocation6 + $0x28] sm:$0xf]
    %v250 = vld [vmem:[#allocation6 + $0x2c] sm:$0xf]
    %v251 = vld [vmem:[#allocation6 + $0x30] sm:$0xf]
    %v252 = vld [vmem:[#allocation6 + $0x34] sm:$0xf]
    %v253 = vld [vmem:[#allocation6 + $0x38] sm:$0xf]
    %v254 = vld [vmem:[#allocation6 + $0x3c] sm:$0xf]
    %v255 = vld [vmem:[%s6] sm:$0x1]
    %v256 = vpack.c.bf16 %v238, %v238
    %v258 = vperm.slane %v255, 0
    %v276 = vunpack.c.l.b16 %v239
    %v277 = vunpack.c.l.b16 %v240
    %v278 = vunpack.c.l.b16 %v241
    %v279 = vunpack.c.l.b16 %v242
    %v280 = vunpack.c.l.b16 %v243
    %v281 = vunpack.c.l.b16 %v244
    %v282 = vunpack.c.l.b16 %v245
    %v283 = vunpack.c.l.b16 %v246
    %v284 = vunpack.c.l.b16 %v247
    %v285 = vunpack.c.l.b16 %v248
    %v286 = vunpack.c.l.b16 %v249
    %v287 = vunpack.c.l.b16 %v250
    %v288 = vunpack.c.l.b16 %v251
    %v289 = vunpack.c.l.b16 %v252
    %v290 = vunpack.c.l.b16 %v253
    %v291 = vunpack.c.l.b16 %v254
    %v292 = vpack.c.b16 %v277, %v276
    %v293 = vpack.c.b16 %v279, %v278
    %v294 = vpack.c.b16 %v281, %v280
    %v295 = vpack.c.b16 %v283, %v282
    %v296 = vpack.c.b16 %v285, %v284
    %v297 = vpack.c.b16 %v287, %v286
    %v298 = vpack.c.b16 %v289, %v288
    %v299 = vpack.c.b16 %v291, %v290
    %308 = vmatpush.bf16.msra.mxu0 %v299
    %309 = vmatpush.bf16.msra.mxu0 %v298
    %310 = vmatpush.bf16.msra.mxu0 %v297
    %311 = vmatpush.bf16.msra.mxu0 %v296
    %312 = vmatpush.bf16.msra.mxu0 %v295
    %313 = vmatpush.bf16.msra.mxu0 %v294
    %314 = vmatpush.bf16.msra.mxu0 %v293
    %315 = vmatpush.bf16.msra.mxu0 %v292
    %316 = vmatmul.bf16.gmra.mxu0 %v256
    %v317 = vpop.f32.mrf.mxu0
    %v318 = vadd.f32 %v258, %v317
    %v319 = vpop.f32.mrf.mxu0
    %320 = vdwg.mxu0
    %321 = vst [vmem:[%s7] sm:$0xff] %v318
    // Predicated region
    $region42: #{encoder_forward.1} parent=1 // pred_check
      _
    $region43: #{encoder_forward.1} parent=1 // pred_check_branch
      %323 = sbr.rel (0) target = $region45
    $region44: #{encoder_forward.1} parent=1 // pred_region
      _
    $region45: #{encoder_forward.1} parent=1 // pred_fallthru
      _
    // Predicated region
    $region46: #{encoder_forward.1} parent=1 // pred_check
      _
    $region47: #{encoder_forward.1} parent=1 // pred_check_branch
      %325 = sbr.rel (0) target = $region49
    $region48: #{encoder_forward.1} parent=1 // pred_region
      _
    $region49: #{encoder_forward.1} parent=1 // pred_fallthru
      _
    %326 = vsyncpa [#allocation3], 1
    %327 = vsyncpa [#allocation5], 1

</llo_original>
